<compile_context>
chip_gen: v7x
topology: tpu7x:2x2x1
jax: 0.10.0
libtpu: 0.0.40
codegen_flags: <defaults>
</compile_context>

<pallas_src>
import functools

import jax
import jax.numpy as jnp
from jax import lax
from jax.experimental import pallas as pl
from jax.experimental.pallas import tpu as pltpu


def _round_up(n, m):
    return ((n + m - 1) // m) * m


def actor_critic_kernel(x_ref, w1_ref, b1_ref, wh_ref, bh_ref, out_ref,
                        *dist_refs, action_dim):
    # x_ref:   [TB, S]        input dtype (cast to weight dtype at the dot)
    # w1_ref:  [S, H_pad]     compute dtype (bf16 default)
    # b1_ref:  [1, H_pad]     f32
    # wh_ref:  [H_pad, N_pad] fused [Wa | Wc | 0-pad], compute dtype
    # bh_ref:  [1, N_pad]     f32
    # out_ref: [TB, N_pad]    f32 lane-dense: logits cols 0..A-1, value col A
    # dist_ref:[TB, N_pad]    f32 (optional): log-probs cols 0..A-1, entropy col A
    cdt = w1_ref.dtype
    h = jnp.dot(x_ref[...].astype(cdt), w1_ref[...],
                preferred_element_type=jnp.float32)
    h = jnp.maximum(h + b1_ref[...], 0.0)                      # bias + relu, f32
    out = jnp.dot(h.astype(cdt), wh_ref[...],
                  preferred_element_type=jnp.float32) + bh_ref[...]
    out_ref[...] = out

    if dist_refs:
        # Fused softmax / log-prob / entropy epilogue: exp/log/recip run on the
        # EUP slot, reductions on the XLU — effectively free under the DMA.
        (dist_ref,) = dist_refs
        col = lax.broadcasted_iota(jnp.int32, out.shape, 1)
        is_logit = col < action_dim
        masked = jnp.where(is_logit, out, jnp.float32(-1e30))
        m = jnp.max(masked, axis=-1, keepdims=True)
        e = jnp.exp(masked - m)
        s = jnp.sum(e, axis=-1, keepdims=True)
        log_z = m + jnp.log(s)
        log_p = jnp.where(is_logit, out - log_z, 0.0)
        p = e * pl.reciprocal(s, approx=True)
        ent = -jnp.sum(p * log_p, axis=-1, keepdims=True)
        dist_ref[...] = jnp.where(col == action_dim,
                                  jnp.broadcast_to(ent, out.shape), log_p)


def prepare_params(params, compute_dtype=jnp.bfloat16):
    """Fuse actor/critic heads; pad only what the MXU/lanes need.

    Weights stored as [in_features, out_features], biases as [1, out].
    x's feature dim S is intentionally NOT padded (full-dim blocks are legal);
    only the hidden dim and the fused head width are lane-aligned.
    """
    w1, b1 = params["w1"], params["b1"]
    wa, ba = params["wa"], params["ba"]
    wc, bc = params["wc"], params["bc"]

    S, H = w1.shape
    A = wa.shape[1]
    # v6e/v7x MXUs are 256x256: align H to 256 once it is big enough;
    # v5e's 128x128 MXU (and tiny hidden dims) are fully fed at 128.
    H_pad = _round_up(H, 256) if H >= 256 else _round_up(H, 128)
    N_pad = _round_up(A + 1, 128)          # fused head width (logits + value)

    w1_p = jnp.zeros((S, H_pad), compute_dtype).at[:, :H].set(
        w1.astype(compute_dtype))
    b1_p = jnp.zeros((1, H_pad), jnp.float32).at[:, :H].set(
        b1.astype(jnp.float32))

    w_heads = jnp.concatenate([wa, wc], axis=1)                 # [H, A+1]
    b_heads = jnp.concatenate([ba, bc], axis=1)                 # [1, A+1]
    wh_p = jnp.zeros((H_pad, N_pad), compute_dtype).at[:H, :A + 1].set(
        w_heads.astype(compute_dtype))
    bh_p = jnp.zeros((1, N_pad), jnp.float32).at[:, :A + 1].set(
        b_heads.astype(jnp.float32))

    return dict(w1=w1_p, b1=b1_p, wh=wh_p, bh=bh_p,
                state_dim=S, action_dim=A, compute_dtype=compute_dtype)


def _const_spec(shape, mode):
    """Weight/bias BlockSpec: constant block index => VMEM-resident."""
    idx = lambda i: (0, 0)
    if mode is None:
        return pl.BlockSpec(shape, idx)
    return pl.BlockSpec(shape, idx, pipeline_mode=mode)


def actor_critic_forward(x, prepped, *, tb_max=2048, return_dist=False,
                         use_core_parallel=False):
    """x: [B, state_dim]. prepped: output of prepare_params.

    Returns (logits, value) or (logits, value, log_probs, entropy).
    Throughput-critical callers can consume the padded lane-dense kernel
    outputs directly to skip the post-kernel slices.
    """
    B, S = x.shape
    assert S == prepped["state_dim"]
    w1, b1, wh, bh = prepped["w1"], prepped["b1"], prepped["wh"], prepped["bh"]
    H_pad = w1.shape[1]
    N_pad = wh.shape[1]
    A = prepped["action_dim"]

    # ---- batch tile ------------------------------------------------------
    # bf16 activations need 16-row sublane alignment; f32 needs 8.
    row_align = 16 if x.dtype == jnp.bfloat16 else 8
    TB = min(tb_max, _round_up(B, row_align))
    # Large single-tile batches: force >=2 grid steps so the "parallel" batch
    # axis can occupy both of v7x's TensorCores.
    if B >= 1024 and _round_up(B, row_align) <= tb_max:
        TB = _round_up((B + 1) // 2, row_align)
    B_pad = _round_up(B, TB)

    # ---- VMEM budget (v7x: 64 MiB physical, 32 MiB scoped default) -------
    vmem_limit = 32 * 1024 * 1024
    n_out = 2 if return_dist else 1
    w_bytes = w1.dtype.itemsize
    footprint = (
        2 * TB * S * x.dtype.itemsize               # double-buffered x tiles
        + 2 * n_out * TB * N_pad * 4                # double-buffered out tiles
        + 2 * (S * H_pad + H_pad * N_pad) * w_bytes  # weights (worst case 2 bufs)
        + 2 * (H_pad + N_pad) * 4)                   # biases
    assert footprint < int(0.9 * vmem_limit), (
        f"VMEM footprint {footprint} bytes exceeds budget; lower tb_max")

    # ---- batch pad only when needed (no lane pad, no dtype cast pass) ----
    if B_pad != B:
        x_in = jnp.zeros((B_pad, S), x.dtype).at[:B].set(x)
    else:
        x_in = x

    kernel = functools.partial(actor_critic_kernel, action_dim=A)
    out_struct = jax.ShapeDtypeStruct((B_pad, N_pad), jnp.float32)
    out_block = pl.BlockSpec((TB, N_pad), lambda i: (i, 0))
    if return_dist:
        out_shape = (out_struct, out_struct)
        out_specs = (out_block, pl.BlockSpec((TB, N_pad), lambda i: (i, 0)))
    else:
        out_shape = out_struct
        out_specs = out_block

    # On v7x, pltpu.CORE_PARALLEL guarantees the batch axis is split across
    # the two TensorCores; plain "parallel" is the portable default.
    dim_sem = (pltpu.CORE_PARALLEL,) if use_core_parallel else ("parallel",)

    def _call(weight_mode):
        grid_spec = pltpu.PrefetchScalarGridSpec(
            num_scalar_prefetch=0,
            grid=(B_pad // TB,),
            in_specs=[
                pl.BlockSpec((TB, S), lambda i: (i, 0)),      # x batch tile
                _const_spec((S, H_pad), weight_mode),          # w1 (resident)
                _const_spec((1, H_pad), weight_mode),          # b1 (resident)
                _const_spec((H_pad, N_pad), weight_mode),      # fused heads
                _const_spec((1, N_pad), weight_mode),          # fused bias
            ],
            out_specs=out_specs,
        )
        return pl.pallas_call(
            kernel,
            out_shape=out_shape,
            grid_spec=grid_spec,
            compiler_params=pltpu.CompilerParams(
                dimension_semantics=dim_sem,
                vmem_limit_bytes=vmem_limit,
            ),
        )(x_in, w1, b1, wh, bh)

    try:
        # Constant-index weights never change block => single pipeline buffer
        # (the default second buffer is pure wasted VMEM at realistic H).
        result = jax.block_until_ready(_call(pl.Buffered(1)))
    except Exception:
        # Portability fallback for jax versions without Buffered(1) support.
        result = jax.block_until_ready(_call(None))

    if return_dist:
        out, dist = result
    else:
        out = result

    logits = out[:B, :A]
    value = out[:B, A:A + 1]
    if return_dist:
        log_probs = dist[:B, :A]
        entropy = dist[:B, A]
        return logits, value, log_probs, entropy
    return logits, value


def init_params(key, state_dim, hidden_dim, action_dim):
    """Deterministic init mimicking nn.Linear default (uniform +-1/sqrt(fan_in)).
    Weights stored as [in_features, out_features]; biases as [1, out]."""
    k1, k2, k3, k4, k5, k6 = jax.random.split(key, 6)

    def lin(kw, kb, fan_in, fan_out):
        bound = 1.0 / jnp.sqrt(fan_in)
        w = jax.random.uniform(kw, (fan_in, fan_out), jnp.float32, -bound, bound)
        b = jax.random.uniform(kb, (1, fan_out), jnp.float32, -bound, bound)
        return w, b

    w1, b1 = lin(k1, k2, state_dim, hidden_dim)
    wa, ba = lin(k3, k4, hidden_dim, action_dim)
    wc, bc = lin(k5, k6, hidden_dim, 1)
    return dict(w1=w1, b1=b1, wa=wa, ba=ba, wc=wc, bc=bc)


if __name__ == "__main__":
    # Small shapes consistent with the module's forward.
    batch, state_dim, hidden_dim, action_dim = 8, 16, 32, 4

    key = jax.random.PRNGKey(0)
    kx, kp = jax.random.split(key)
    x = jax.random.normal(kx, (batch, state_dim), jnp.float32)
    params = init_params(kp, state_dim, hidden_dim, action_dim)

    # Pure-JAX reference of the same forward pass (+ distribution stats).
    h_ref = jnp.maximum(x @ params["w1"] + params["b1"], 0.0)
    logits_ref = h_ref @ params["wa"] + params["ba"]
    value_ref = h_ref @ params["wc"] + params["bc"]
    log_probs_ref = jax.nn.log_softmax(logits_ref, axis=-1)
    entropy_ref = -jnp.sum(jnp.exp(log_probs_ref) * log_probs_ref, axis=-1)

    # f32 path — matches the reference tightly, exercises the fused epilogue.
    prepped_f32 = prepare_params(params, compute_dtype=jnp.float32)
    logits, value, log_probs, entropy = actor_critic_forward(
        x, prepped_f32, return_dist=True)
    jax.block_until_ready((logits, value, log_probs, entropy))
    assert logits.shape == (batch, action_dim) and value.shape == (batch, 1)
    assert jnp.allclose(logits, logits_ref, atol=1e-5)
    assert jnp.allclose(value, value_ref, atol=1e-5)
    assert jnp.allclose(log_probs, log_probs_ref, atol=1e-4, rtol=1e-4)
    assert jnp.allclose(entropy, entropy_ref, atol=2e-3, rtol=2e-3)

    # Default bf16 weights (f32 MXU accumulation) — loosened tolerance.
    prepped_bf16 = prepare_params(params)      # bf16 default
    logits16, value16 = actor_critic_forward(x, prepped_bf16)
    jax.block_until_ready((logits16, value16))
    assert jnp.allclose(logits16, logits_ref, atol=5e-2, rtol=5e-2)
    assert jnp.allclose(value16, value_ref, atol=5e-2, rtol=5e-2)

    print("KERNEL_OK")
</pallas_src>

<mosaic_0001>
module attributes {stable_mosaic.version = 11 : i64} {
  func.func @actor_critic_kernel(%arg0: i32, %arg1: memref<8x16xf32, #tpu.memory_space<vmem>>, %arg2: memref<16x128xf32, #tpu.memory_space<vmem>>, %arg3: memref<1x128xf32, #tpu.memory_space<vmem>>, %arg4: memref<128x128xf32, #tpu.memory_space<vmem>>, %arg5: memref<1x128xf32, #tpu.memory_space<vmem>>, %arg6: memref<8x128xf32, #tpu.memory_space<vmem>>, %arg7: memref<8x128xf32, #tpu.memory_space<vmem>>) attributes {dimension_semantics = [#tpu.dimension_semantics<parallel>], iteration_bounds = array<i64: 1>, scalar_prefetch = 0 : i64, scratch_operands = 0 : i64, tpu.core_type = #tpu.core_type<tc>, window_params = [{transform_indices = @transform_0, window_bounds = array<i64: 8, 16>}, {pipeline_mode = #tpu.pipeline_mode<synchronous>, transform_indices = @transform_1, window_bounds = array<i64: 16, 128>}, {pipeline_mode = #tpu.pipeline_mode<synchronous>, transform_indices = @transform_2, window_bounds = array<i64: 1, 128>}, {pipeline_mode = #tpu.pipeline_mode<synchronous>, transform_indices = @transform_3, window_bounds = array<i64: 128, 128>}, {pipeline_mode = #tpu.pipeline_mode<synchronous>, transform_indices = @transform_4, window_bounds = array<i64: 1, 128>}, {transform_indices = @transform_5, window_bounds = array<i64: 8, 128>}, {transform_indices = @transform_6, window_bounds = array<i64: 8, 128>}]} {
    %c0 = arith.constant 0 : index
    %c0_0 = arith.constant 0 : index
    %0 = vector.load %arg1[%c0, %c0_0] : memref<8x16xf32, #tpu.memory_space<vmem>>, vector<8x16xf32>
    %c0_1 = arith.constant 0 : index
    %c0_2 = arith.constant 0 : index
    %1 = vector.load %arg2[%c0_1, %c0_2] : memref<16x128xf32, #tpu.memory_space<vmem>>, vector<16x128xf32>
    %cst = arith.constant dense<0.000000e+00> : vector<8x128xf32>
    %2 = tpu.matmul %0, %1, %cst {dimension_numbers = #tpu.dot_dimension_numbers<[1], [0], [0], [1], [0, 0, 1, 1], [], []>} : vector<8x16xf32>, vector<16x128xf32>, vector<8x128xf32> -> vector<8x128xf32>
    %c0_3 = arith.constant 0 : index
    %c0_4 = arith.constant 0 : index
    %3 = vector.load %arg3[%c0_3, %c0_4] : memref<1x128xf32, #tpu.memory_space<vmem>>, vector<1x128xf32>
    %4 = vector.broadcast %3 : vector<1x128xf32> to vector<8x128xf32>
    %5 = arith.addf %2, %4 : vector<8x128xf32>
    %cst_5 = arith.constant 0.000000e+00 : f32
    %6 = vector.broadcast %cst_5 : f32 to vector<8x128xf32>
    %7 = arith.maximumf %5, %6 : vector<8x128xf32>
    %c0_6 = arith.constant 0 : index
    %c0_7 = arith.constant 0 : index
    %8 = vector.load %arg4[%c0_6, %c0_7] : memref<128x128xf32, #tpu.memory_space<vmem>>, vector<128x128xf32>
    %cst_8 = arith.constant dense<0.000000e+00> : vector<8x128xf32>
    %9 = tpu.matmul %7, %8, %cst_8 {dimension_numbers = #tpu.dot_dimension_numbers<[1], [0], [0], [1], [0, 0, 1, 1], [], []>} : vector<8x128xf32>, vector<128x128xf32>, vector<8x128xf32> -> vector<8x128xf32>
    %c0_9 = arith.constant 0 : index
    %c0_10 = arith.constant 0 : index
    %10 = vector.load %arg5[%c0_9, %c0_10] : memref<1x128xf32, #tpu.memory_space<vmem>>, vector<1x128xf32>
    %11 = vector.broadcast %10 : vector<1x128xf32> to vector<8x128xf32>
    %12 = arith.addf %9, %11 : vector<8x128xf32>
    %c0_11 = arith.constant 0 : index
    %c0_12 = arith.constant 0 : index
    %13 = vector.load %arg6[%c0_11, %c0_12] : memref<8x128xf32, #tpu.memory_space<vmem>>, vector<8x128xf32>
    tpu.vector_store %arg6[%c0_11, %c0_12], %12 {strides = array<i32>} : memref<8x128xf32, #tpu.memory_space<vmem>>, vector<8x128xf32>,
    %14 = tpu.iota {dimensions = array<i32: 1>} : vector<8x128xi32>
    %c4_i32 = arith.constant 4 : i32
    %15 = vector.broadcast %c4_i32 : i32 to vector<8x128xi32>
    %16 = arith.cmpi slt, %14, %15 : vector<8x128xi32>
    %cst_13 = arith.constant -1.000000e+30 : f32
    %17 = vector.broadcast %cst_13 : f32 to vector<8x128xf32>
    %18 = arith.select %16, %12, %17 : vector<8x128xi1>, vector<8x128xf32>
    %cst_14 = arith.constant dense<0xFF800000> : vector<8xf32>
    %19 = vector.multi_reduction <maximumf>, %18, %cst_14 [1] : vector<8x128xf32> to vector<8xf32>
    %20 = vector.shape_cast %19 : vector<8xf32> to vector<8x1xf32>
    %21 = vector.broadcast %20 : vector<8x1xf32> to vector<8x128xf32>
    %22 = arith.subf %18, %21 : vector<8x128xf32>
    %23 = math.exp %22 : vector<8x128xf32>
    %cst_15 = arith.constant dense<0.000000e+00> : vector<8xf32>
    %24 = vector.multi_reduction <add>, %23, %cst_15 [1] : vector<8x128xf32> to vector<8xf32>
    %25 = vector.shape_cast %24 : vector<8xf32> to vector<8x1xf32>
    %26 = math.log %25 : vector<8x1xf32>
    %27 = arith.addf %20, %26 : vector<8x1xf32>
    %28 = vector.broadcast %27 : vector<8x1xf32> to vector<8x128xf32>
    %29 = arith.subf %12, %28 : vector<8x128xf32>
    %cst_16 = arith.constant 0.000000e+00 : f32
    %30 = vector.broadcast %cst_16 : f32 to vector<8x128xf32>
    %31 = arith.select %16, %29, %30 : vector<8x128xi1>, vector<8x128xf32>
    %32 = tpu.reciprocal %25 {approx = true} : vector<8x1xf32> -> vector<8x1xf32>
    %33 = vector.broadcast %32 : vector<8x1xf32> to vector<8x128xf32>
    %34 = arith.mulf %23, %33 : vector<8x128xf32>
    %35 = arith.mulf %34, %31 : vector<8x128xf32>
    %cst_17 = arith.constant dense<0.000000e+00> : vector<8xf32>
    %36 = vector.multi_reduction <add>, %35, %cst_17 [1] : vector<8x128xf32> to vector<8xf32>
    %37 = vector.shape_cast %36 : vector<8xf32> to vector<8x1xf32>
    %cst_18 = arith.constant 0.000000e+00 : f32
    %38 = vector.broadcast %cst_18 : f32 to vector<8x1xf32>
    %39 = arith.subf %38, %37 : vector<8x1xf32>
    %c4_i32_19 = arith.constant 4 : i32
    %40 = vector.broadcast %c4_i32_19 : i32 to vector<8x128xi32>
    %41 = arith.cmpi eq, %14, %40 : vector<8x128xi32>
    %42 = vector.shape_cast %39 : vector<8x1xf32> to vector<8x1xf32>
    %43 = vector.broadcast %42 : vector<8x1xf32> to vector<8x128xf32>
    %44 = arith.select %41, %43, %31 : vector<8x128xi1>, vector<8x128xf32>
    %c0_20 = arith.constant 0 : index
    %c0_21 = arith.constant 0 : index
    %45 = vector.load %arg7[%c0_20, %c0_21] : memref<8x128xf32, #tpu.memory_space<vmem>>, vector<8x128xf32>
    tpu.vector_store %arg7[%c0_20, %c0_21], %44 {strides = array<i32>} : memref<8x128xf32, #tpu.memory_space<vmem>>, vector<8x128xf32>,
    return
  }
  func.func @transform_0(%arg0: i32) -> (i32, i32) {
    %c0_i32 = arith.constant 0 : i32
    %c0_i32_0 = arith.constant 0 : i32
    return %arg0, %c0_i32 : i32, i32
  }
  func.func @transform_1(%arg0: i32) -> (i32, i32) {
    %c0_i32 = arith.constant 0 : i32
    %c0_i32_0 = arith.constant 0 : i32
    %c0_i32_1 = arith.constant 0 : i32
    return %c0_i32, %c0_i32_0 : i32, i32
  }
  func.func @transform_2(%arg0: i32) -> (i32, i32) {
    %c0_i32 = arith.constant 0 : i32
    %c0_i32_0 = arith.constant 0 : i32
    %c0_i32_1 = arith.constant 0 : i32
    return %c0_i32, %c0_i32_0 : i32, i32
  }
  func.func @transform_3(%arg0: i32) -> (i32, i32) {
    %c0_i32 = arith.constant 0 : i32
    %c0_i32_0 = arith.constant 0 : i32
    %c0_i32_1 = arith.constant 0 : i32
    return %c0_i32, %c0_i32_0 : i32, i32
  }
  func.func @transform_4(%arg0: i32) -> (i32, i32) {
    %c0_i32 = arith.constant 0 : i32
    %c0_i32_0 = arith.constant 0 : i32
    %c0_i32_1 = arith.constant 0 : i32
    return %c0_i32, %c0_i32_0 : i32, i32
  }
  func.func @transform_5(%arg0: i32) -> (i32, i32) {
    %c0_i32 = arith.constant 0 : i32
    %c0_i32_0 = arith.constant 0 : i32
    return %arg0, %c0_i32 : i32, i32
  }
  func.func @transform_6(%arg0: i32) -> (i32, i32) {
    %c0_i32 = arith.constant 0 : i32
    %c0_i32_0 = arith.constant 0 : i32
    return %arg0, %c0_i32 : i32, i32
  }
}

module attributes {stable_mosaic.version = 11 : i64} {
  func.func @actor_critic_kernel(%arg0: i32, %arg1: memref<8x16xf32, #tpu.memory_space<vmem>>, %arg2: memref<16x128xf32, #tpu.memory_space<vmem>>, %arg3: memref<1x128xf32, #tpu.memory_space<vmem>>, %arg4: memref<128x128xf32, #tpu.memory_space<vmem>>, %arg5: memref<1x128xf32, #tpu.memory_space<vmem>>, %arg6: memref<8x128xf32, #tpu.memory_space<vmem>>, %arg7: memref<8x128xf32, #tpu.memory_space<vmem>>) attributes {dimension_semantics = [#tpu.dimension_semantics<parallel>], iteration_bounds = array<i64: 1>, scalar_prefetch = 0 : i64, scratch_operands = 0 : i64, tpu.core_type = #tpu.core_type<tc>, window_params = [{transform_indices = @transform_0, window_bounds = array<i64: 8, 16>}, {pipeline_mode = #tpu.pipeline_mode<synchronous>, transform_indices = @transform_1, window_bounds = array<i64: 16, 128>}, {pipeline_mode = #tpu.pipeline_mode<synchronous>, transform_indices = @transform_2, window_bounds = array<i64: 1, 128>}, {pipeline_mode = #tpu.pipeline_mode<synchronous>, transform_indices = @transform_3, window_bounds = array<i64: 128, 128>}, {pipeline_mode = #tpu.pipeline_mode<synchronous>, transform_indices = @transform_4, window_bounds = array<i64: 1, 128>}, {transform_indices = @transform_5, window_bounds = array<i64: 8, 128>}, {transform_indices = @transform_6, window_bounds = array<i64: 8, 128>}]} {
    %c0 = arith.constant 0 : index
    %c0_0 = arith.constant 0 : index
    %0 = vector.load %arg1[%c0, %c0_0] : memref<8x16xf32, #tpu.memory_space<vmem>>, vector<8x16xf32>
    %c0_1 = arith.constant 0 : index
    %c0_2 = arith.constant 0 : index
    %1 = vector.load %arg2[%c0_1, %c0_2] : memref<16x128xf32, #tpu.memory_space<vmem>>, vector<16x128xf32>
    %cst = arith.constant dense<0.000000e+00> : vector<8x128xf32>
    %2 = tpu.matmul %0, %1, %cst {dimension_numbers = #tpu.dot_dimension_numbers<[1], [0], [0], [1], [0, 0, 1, 1], [], []>} : vector<8x16xf32>, vector<16x128xf32>, vector<8x128xf32> -> vector<8x128xf32>
    %c0_3 = arith.constant 0 : index
    %c0_4 = arith.constant 0 : index
    %3 = vector.load %arg3[%c0_3, %c0_4] : memref<1x128xf32, #tpu.memory_space<vmem>>, vector<1x128xf32>
    %4 = vector.broadcast %3 : vector<1x128xf32> to vector<8x128xf32>
    %5 = arith.addf %2, %4 : vector<8x128xf32>
    %cst_5 = arith.constant 0.000000e+00 : f32
    %6 = vector.broadcast %cst_5 : f32 to vector<8x128xf32>
    %7 = arith.maximumf %5, %6 : vector<8x128xf32>
    %c0_6 = arith.constant 0 : index
    %c0_7 = arith.constant 0 : index
    %8 = vector.load %arg4[%c0_6, %c0_7] : memref<128x128xf32, #tpu.memory_space<vmem>>, vector<128x128xf32>
    %cst_8 = arith.constant dense<0.000000e+00> : vector<8x128xf32>
    %9 = tpu.matmul %7, %8, %cst_8 {dimension_numbers = #tpu.dot_dimension_numbers<[1], [0], [0], [1], [0, 0, 1, 1], [], []>} : vector<8x128xf32>, vector<128x128xf32>, vector<8x128xf32> -> vector<8x128xf32>
    %c0_9 = arith.constant 0 : index
    %c0_10 = arith.constant 0 : index
    %10 = vector.load %arg5[%c0_9, %c0_10] : memref<1x128xf32, #tpu.memory_space<vmem>>, vector<1x128xf32>
    %11 = vector.broadcast %10 : vector<1x128xf32> to vector<8x128xf32>
    %12 = arith.addf %9, %11 : vector<8x128xf32>
    %c0_11 = arith.constant 0 : index
    %c0_12 = arith.constant 0 : index
    %13 = vector.load %arg6[%c0_11, %c0_12] : memref<8x128xf32, #tpu.memory_space<vmem>>, vector<8x128xf32>
    tpu.vector_store %arg6[%c0_11, %c0_12], %12 {strides = array<i32>} : memref<8x128xf32, #tpu.memory_space<vmem>>, vector<8x128xf32>,
    %14 = tpu.iota {dimensions = array<i32: 1>} : vector<8x128xi32>
    %c4_i32 = arith.constant 4 : i32
    %15 = vector.broadcast %c4_i32 : i32 to vector<8x128xi32>
    %16 = arith.cmpi slt, %14, %15 : vector<8x128xi32>
    %cst_13 = arith.constant -1.000000e+30 : f32
    %17 = vector.broadcast %cst_13 : f32 to vector<8x128xf32>
    %18 = arith.select %16, %12, %17 : vector<8x128xi1>, vector<8x128xf32>
    %cst_14 = arith.constant dense<0xFF800000> : vector<8xf32>
    %19 = vector.multi_reduction <maximumf>, %18, %cst_14 [1] : vector<8x128xf32> to vector<8xf32>
    %20 = vector.shape_cast %19 : vector<8xf32> to vector<8x1xf32>
    %21 = vector.broadcast %20 : vector<8x1xf32> to vector<8x128xf32>
    %22 = arith.subf %18, %21 : vector<8x128xf32>
    %23 = math.exp %22 : vector<8x128xf32>
    %cst_15 = arith.constant dense<0.000000e+00> : vector<8xf32>
    %24 = vector.multi_reduction <add>, %23, %cst_15 [1] : vector<8x128xf32> to vector<8xf32>
    %25 = vector.shape_cast %24 : vector<8xf32> to vector<8x1xf32>
    %26 = math.log %25 : vector<8x1xf32>
    %27 = arith.addf %20, %26 : vector<8x1xf32>
    %28 = vector.broadcast %27 : vector<8x1xf32> to vector<8x128xf32>
    %29 = arith.subf %12, %28 : vector<8x128xf32>
    %cst_16 = arith.constant 0.000000e+00 : f32
    %30 = vector.broadcast %cst_16 : f32 to vector<8x128xf32>
    %31 = arith.select %16, %29, %30 : vector<8x128xi1>, vector<8x128xf32>
    %32 = tpu.reciprocal %25 {approx = true} : vector<8x1xf32> -> vector<8x1xf32>
    %33 = vector.broadcast %32 : vector<8x1xf32> to vector<8x128xf32>
    %34 = arith.mulf %23, %33 : vector<8x128xf32>
    %35 = arith.mulf %34, %31 : vector<8x128xf32>
    %cst_17 = arith.constant dense<0.000000e+00> : vector<8xf32>
    %36 = vector.multi_reduction <add>, %35, %cst_17 [1] : vector<8x128xf32> to vector<8xf32>
    %37 = vector.shape_cast %36 : vector<8xf32> to vector<8x1xf32>
    %cst_18 = arith.constant 0.000000e+00 : f32
    %38 = vector.broadcast %cst_18 : f32 to vector<8x1xf32>
    %39 = arith.subf %38, %37 : vector<8x1xf32>
    %c4_i32_19 = arith.constant 4 : i32
    %40 = vector.broadcast %c4_i32_19 : i32 to vector<8x128xi32>
    %41 = arith.cmpi eq, %14, %40 : vector<8x128xi32>
    %42 = vector.shape_cast %39 : vector<8x1xf32> to vector<8x1xf32>
    %43 = vector.broadcast %42 : vector<8x1xf32> to vector<8x128xf32>
    %44 = arith.select %41, %43, %31 : vector<8x128xi1>, vector<8x128xf32>
    %c0_20 = arith.constant 0 : index
    %c0_21 = arith.constant 0 : index
    %45 = vector.load %arg7[%c0_20, %c0_21] : memref<8x128xf32, #tpu.memory_space<vmem>>, vector<8x128xf32>
    tpu.vector_store %arg7[%c0_20, %c0_21], %44 {strides = array<i32>} : memref<8x128xf32, #tpu.memory_space<vmem>>, vector<8x128xf32>,
    return
  }
  func.func @transform_0(%arg0: i32) -> (i32, i32) {
    %c0_i32 = arith.constant 0 : i32
    %c0_i32_0 = arith.constant 0 : i32
    return %arg0, %c0_i32 : i32, i32
  }
  func.func @transform_1(%arg0: i32) -> (i32, i32) {
    %c0_i32 = arith.constant 0 : i32
    %c0_i32_0 = arith.constant 0 : i32
    %c0_i32_1 = arith.constant 0 : i32
    return %c0_i32, %c0_i32_0 : i32, i32
  }
  func.func @transform_2(%arg0: i32) -> (i32, i32) {
    %c0_i32 = arith.constant 0 : i32
    %c0_i32_0 = arith.constant 0 : i32
    %c0_i32_1 = arith.constant 0 : i32
    return %c0_i32, %c0_i32_0 : i32, i32
  }
  func.func @transform_3(%arg0: i32) -> (i32, i32) {
    %c0_i32 = arith.constant 0 : i32
    %c0_i32_0 = arith.constant 0 : i32
    %c0_i32_1 = arith.constant 0 : i32
    return %c0_i32, %c0_i32_0 : i32, i32
  }
  func.func @transform_4(%arg0: i32) -> (i32, i32) {
    %c0_i32 = arith.constant 0 : i32
    %c0_i32_0 = arith.constant 0 : i32
    %c0_i32_1 = arith.constant 0 : i32
    return %c0_i32, %c0_i32_0 : i32, i32
  }
  func.func @transform_5(%arg0: i32) -> (i32, i32) {
    %c0_i32 = arith.constant 0 : i32
    %c0_i32_0 = arith.constant 0 : i32
    return %arg0, %c0_i32 : i32, i32
  }
  func.func @transform_6(%arg0: i32) -> (i32, i32) {
    %c0_i32 = arith.constant 0 : i32
    %c0_i32_0 = arith.constant 0 : i32
    return %arg0, %c0_i32 : i32, i32
  }
}

</mosaic_0001>

<llo_original>
// kernel: tpu_custom_call.1
$region0: #{tpu_custom_call.1}
  #allocation0 [shape = 'u32[]', space=smem, size = 0x4, offset = 0x4, fixed_abs, tag = 'smem constant byte address 0x4 - core index']
  #allocation1 [shape = 'u32[144,128]{1,0:T(1,128)}', space=vmem, size = 0x12000, scoped, tag = 'internal scratch']
  %s0 = inlined_call_operand.hbm [shape: f32[8,16], index: 0, kind: input, shape index: {}]
  %s1 = inlined_call_operand.hbm [shape: f32[16,128], index: 1, kind: input, shape index: {}]
  %s2 = inlined_call_operand.vmem [shape: f32[1,128], index: 2, kind: input, shape index: {}]
  %s3 = inlined_call_operand.hbm [shape: f32[128,128], index: 3, kind: input, shape index: {}]
  %s4 = inlined_call_operand.vmem [shape: f32[1,128], index: 4, kind: input, shape index: {}]
  %s5 = inlined_call_operand.hbm [shape: f32[8,128], index: 5, kind: output, shape index: {0}]
  %s6 = inlined_call_operand.hbm [shape: f32[8,128], index: 6, kind: output, shape index: {1}]
  %7 = xla_tuple %s5, %s6
  %s8 = sld [smem:[#allocation0]]
  $region50: #{tpu_custom_call.1} parent=0
    _
  %s10 = ssub.s32 1, %s8
  %s11 = scalar_select 0, %s10, %s8
  $region1: #{tpu_custom_call.1} parent=0
    #allocation2 [shape = 'u8[4096]{0}', space=vmem, size = 0x1000, scoped, tag = 'input window, operand 0, single buffered']
    #allocation3 [shape = 's32[1]{0}', space=sflag, size = 0x4, scoped, tag = 'scoped memory for tpu_custom_call.1']
    #allocation4 [shape = 's32[1]{0}', space=sflag, size = 0x4, scoped, tag = 'scoped memory for tpu_custom_call.1']
    #allocation5 [shape = 'u8[8192]{0}', space=vmem, size = 0x2000, scoped, tag = 'input window, operand 1, single buffered']
    #allocation6 [shape = 's32[1]{0}', space=sflag, size = 0x4, scoped, tag = 'scoped memory for tpu_custom_call.1']
    #allocation7 [shape = 'u8[65536]{0}', space=vmem, size = 0x10000, scoped, tag = 'input window, operand 3, single buffered']
    #allocation8 [shape = 'u8[4096]{0}', space=vmem, size = 0x1000, scoped, tag = 'output window, operand 0, single buffered']
    #allocation9 [shape = 'u8[4096]{0}', space=vmem, size = 0x1000, scoped, tag = 'output window, operand 1, single buffered']
    #allocation10 [shape = 's32[1]{0}', space=sflag, size = 0x4, scoped, tag = 'scoped memory for tpu_custom_call.1']
    %12 = vsyncpa [#allocation3], 0
    %13 = vsyncpa [#allocation6], 0
    %14 = vsyncpa [#allocation4], 0
    %15 = vsyncpa [#allocation10], 0
    // Predicated region
    $region2: #{tpu_custom_call.1} parent=1 // pred_check
      _
    $region3: #{tpu_custom_call.1} parent=1 // pred_check_branch
      %17 = sbr.rel (0) target = $region5
    $region4: #{tpu_custom_call.1} parent=1 // pred_region
      %s19 = ssub.s32 128, 128
      %20 = vsyncadd [#allocation3], %s19
      %s22 = sshll.u32 [#allocation2], 4
      %s23 = int_to_ptr.vmem [resolvable:$true] %s22
      %25 = dma.hbm_to_vmem [thread:$0]  %s0, 128, %s23, [#allocation3]
    $region5: #{tpu_custom_call.1} parent=1 // pred_fallthru
      _
    // Predicated region
    $region6: #{tpu_custom_call.1} parent=1 // pred_check
      _
    $region7: #{tpu_custom_call.1} parent=1 // pred_check_branch
      %27 = sbr.rel (0) target = $region9
    $region8: #{tpu_custom_call.1} parent=1 // pred_region
      %s29 = ssub.s32 256, 256
      %30 = vsyncadd [#allocation6], %s29
      %s31 = sshll.u32 [#allocation5], 4
      %s32 = int_to_ptr.vmem [resolvable:$true] %s31
      %37 = dma.hbm_to_vmem [thread:$0]  %s1, 256, %s32, [#allocation6], 128, 128, 8
    $region9: #{tpu_custom_call.1} parent=1 // pred_fallthru
      _
    // Predicated region
    $region10: #{tpu_custom_call.1} parent=1 // pred_check
      _
    $region11: #{tpu_custom_call.1} parent=1 // pred_check_branch
      %39 = sbr.rel (0) target = $region13
    $region12: #{tpu_custom_call.1} parent=1 // pred_region
      _
    $region13: #{tpu_custom_call.1} parent=1 // pred_fallthru
      _
    // Predicated region
    $region14: #{tpu_custom_call.1} parent=1 // pred_check
      _
    $region15: #{tpu_custom_call.1} parent=1 // pred_check_branch
      %41 = sbr.rel (0) target = $region17
    $region16: #{tpu_custom_call.1} parent=1 // pred_region
      %s43 = ssub.s32 2048, 2048
      %44 = vsyncadd [#allocation6], %s43
      %s45 = sshll.u32 [#allocation7], 4
      %s46 = int_to_ptr.vmem [resolvable:$true] %s45
      %51 = dma.hbm_to_vmem [thread:$0]  %s3, 2048, %s46, [#allocation6], 128, 128, 8
    $region17: #{tpu_custom_call.1} parent=1 // pred_fallthru
      _
    // Predicated region
    $region18: #{tpu_custom_call.1} parent=1 // pred_check
      _
    $region19: #{tpu_custom_call.1} parent=1 // pred_check_branch
      %53 = sbr.rel (0) target = $region21
    $region20: #{tpu_custom_call.1} parent=1 // pred_region
      _
    $region21: #{tpu_custom_call.1} parent=1 // pred_fallthru
      _
    // Predicated region
    $region22: #{tpu_custom_call.1} parent=1 // pred_check
      _
    $region23: #{tpu_custom_call.1} parent=1 // pred_check_branch
      %55 = sbr.rel (0) target = $region25
    $region24: #{tpu_custom_call.1} parent=1 // pred_region
      %56 = dma.done [#allocation3], 128
    $region25: #{tpu_custom_call.1} parent=1 // pred_fallthru
      _
    // Predicated region
    $region26: #{tpu_custom_call.1} parent=1 // pred_check
      _
    $region27: #{tpu_custom_call.1} parent=1 // pred_check_branch
      %58 = sbr.rel (0) target = $region29
    $region28: #{tpu_custom_call.1} parent=1 // pred_region
      %59 = dma.done [#allocation6], 256
    $region29: #{tpu_custom_call.1} parent=1 // pred_fallthru
      _
    // Predicated region
    $region30: #{tpu_custom_call.1} parent=1 // pred_check
      _
    $region31: #{tpu_custom_call.1} parent=1 // pred_check_branch
      %61 = sbr.rel (0) target = $region33
    $region32: #{tpu_custom_call.1} parent=1 // pred_region
      %62 = dma.done [#allocation6], 2048
    $region33: #{tpu_custom_call.1} parent=1 // pred_fallthru
      _
    %v63 = vld [vmem:[#allocation2] sm:$0xff]
    %v64 = vld [vmem:[#allocation5] sm:$0xff]
    %v65 = vld [vmem:[#allocation5 + $0x8] sm:$0xff]
    %v66 = vld [vmem:[%s2] sm:$0x1]
    %v68 = vlaneseq
    %v69 = vshrl.u32 %v68, 7
    %v70 = vsub.s32 0, %v69
    %v71 = vrot.slane %v66, %v70
    %vm73 = vcmask 130048
    %v75 = vsel %vm73, %v63, 0
    %77 = vmatprep.subr.mxu0 0.0
    %78 = vmatpush1.msra.mxu0 %v64
    %79 = vmatprep.subr.mxu0 0.0
    %80 = vmatpush1.msra.mxu0 %v65
    %81 = vmatprep.subr.mxu0 0.0
    %82 = vmatpush1.msra.mxu0 0.0
    %83 = vmatprep.subr.mxu0 0.0
    %84 = vmatpush1.msra.mxu0 0.0
    %85 = vmatprep.subr.mxu0 0.0
    %86 = vmatpush1.msra.mxu0 0.0
    %87 = vmatprep.subr.mxu0 0.0
    %88 = vmatpush1.msra.mxu0 0.0
    %89 = vmatprep.subr.mxu0 0.0
    %90 = vmatpush1.msra.mxu0 0.0
    %91 = vmatprep.subr.mxu0 0.0
    %92 = vmatpush1.msra.mxu0 0.0
    %93 = vmatprep.subr.mxu0 0.0
    %94 = vmatpush1.msra.mxu0 0.0
    %95 = vmatprep.subr.mxu0 0.0
    %96 = vmatpush1.msra.mxu0 0.0
    %97 = vmatprep.subr.mxu0 0.0
    %98 = vmatpush1.msra.mxu0 0.0
    %99 = vmatprep.subr.mxu0 0.0
    %100 = vmatpush1.msra.mxu0 0.0
    %101 = vmatprep.subr.mxu0 0.0
    %102 = vmatpush1.msra.mxu0 0.0
    %103 = vmatprep.subr.mxu0 0.0
    %104 = vmatpush1.msra.mxu0 0.0
    %105 = vmatprep.subr.mxu0 0.0
    %106 = vmatpush1.msra.mxu0 0.0
    %107 = vmatprep.subr.mxu0 0.0
    %108 = vmatpush1.msra.mxu0 0.0
    %109 = vmatprep.subr.mxu0 0.0
    %110 = vmatpush1.msra.mxu0 0.0
    %111 = vmatprep.subr.mxu0 0.0
    %112 = vmatpush1.msra.mxu0 0.0
    %113 = vmatprep.subr.mxu0 0.0
    %114 = vmatpush1.msra.mxu0 0.0
    %115 = vmatprep.subr.mxu0 0.0
    %116 = vmatpush1.msra.mxu0 0.0
    %117 = vmatprep.subr.mxu0 0.0
    %118 = vmatpush1.msra.mxu0 0.0
    %119 = vmatprep.subr.mxu0 0.0
    %120 = vmatpush1.msra.mxu0 0.0
    %121 = vmatprep.subr.mxu0 0.0
    %122 = vmatpush1.msra.mxu0 0.0
    %123 = vmatprep.subr.mxu0 0.0
    %124 = vmatpush1.msra.mxu0 0.0
    %125 = vmatprep.subr.mxu0 0.0
    %126 = vmatpush1.msra.mxu0 0.0
    %127 = vmatprep.subr.mxu0 0.0
    %128 = vmatpush1.msra.mxu0 0.0
    %129 = vmatprep.subr.mxu0 0.0
    %130 = vmatpush1.msra.mxu0 0.0
    %131 = vmatprep.subr.mxu0 0.0
    %132 = vmatpush1.msra.mxu0 0.0
    %133 = vmatprep.subr.mxu0 0.0
    %134 = vmatpush1.msra.mxu0 0.0
    %135 = vmatprep.subr.mxu0 0.0
    %136 = vmatpush1.msra.mxu0 0.0
    %137 = vmatprep.subr.mxu0 0.0
    %138 = vmatpush1.msra.mxu0 0.0
    %139 = vmatprep.subr.mxu0 0.0
    %140 = vmatpush1.msra.mxu0 0.0
    %141 = vmatprep.mubr.f32.mxu0 0.0
    %142 = vmatmul.mubr.f32.gmra.mrb[0].mxu0 %v75
    %v143 = vpop.f32.mrb[0].mxu0
    %v144 = vadd.f32 %v71, %v143
    %v145 = vpop.f32.mrb[0].mxu0
    %146 = vdwg.mxu0
    %v147 = vmax.f32 %v144, 0.0
    %v148 = vld [vmem:[#allocation7] sm:$0xff]
    %v149 = vld [vmem:[#allocation7 + $0x8] sm:$0xff]
    %v150 = vld [vmem:[#allocation7 + $0x10] sm:$0xff]
    %v151 = vld [vmem:[#allocation7 + $0x18] sm:$0xff]
    %v152 = vld [vmem:[#allocation7 + $0x20] sm:$0xff]
    %v153 = vld [vmem:[#allocation7 + $0x28] sm:$0xff]
    %v154 = vld [vmem:[#allocation7 + $0x30] sm:$0xff]
    %v155 = vld [vmem:[#allocation7 + $0x38] sm:$0xff]
    %v156 = vld [vmem:[#allocation7 + $0x40] sm:$0xff]
    %v157 = vld [vmem:[#allocation7 + $0x48] sm:$0xff]
    %v158 = vld [vmem:[#allocation7 + $0x50] sm:$0xff]
    %v159 = vld [vmem:[#allocation7 + $0x58] sm:$0xff]
    %v160 = vld [vmem:[#allocation7 + $0x60] sm:$0xff]
    %v161 = vld [vmem:[#allocation7 + $0x68] sm:$0xff]
    %v162 = vld [vmem:[#allocation7 + $0x70] sm:$0xff]
    %v163 = vld [vmem:[#allocation7 + $0x78] sm:$0xff]
    %v164 = vld [vmem:[%s4] sm:$0x1]
    %v166 = vlaneseq
    %v167 = vshrl.u32 %v166, 7
    %v168 = vsub.s32 0, %v167
    %v169 = vrot.slane %v164, %v168
    %171 = vmatprep.subr.mxu0 0.0
    %172 = vmatpush1.msra.mxu0 %v148
    %173 = vmatprep.subr.mxu0 0.0
    %174 = vmatpush1.msra.mxu0 %v149
    %175 = vmatprep.subr.mxu0 0.0
    %176 = vmatpush1.msra.mxu0 %v150
    %177 = vmatprep.subr.mxu0 0.0
    %178 = vmatpush1.msra.mxu0 %v151
    %179 = vmatprep.subr.mxu0 0.0
    %180 = vmatpush1.msra.mxu0 %v152
    %181 = vmatprep.subr.mxu0 0.0
    %182 = vmatpush1.msra.mxu0 %v153
    %183 = vmatprep.subr.mxu0 0.0
    %184 = vmatpush1.msra.mxu0 %v154
    %185 = vmatprep.subr.mxu0 0.0
    %186 = vmatpush1.msra.mxu0 %v155
    %187 = vmatprep.subr.mxu0 0.0
    %188 = vmatpush1.msra.mxu0 %v156
    %189 = vmatprep.subr.mxu0 0.0
    %190 = vmatpush1.msra.mxu0 %v157
    %191 = vmatprep.subr.mxu0 0.0
    %192 = vmatpush1.msra.mxu0 %v158
    %193 = vmatprep.subr.mxu0 0.0
    %194 = vmatpush1.msra.mxu0 %v159
    %195 = vmatprep.subr.mxu0 0.0
    %196 = vmatpush1.msra.mxu0 %v160
    %197 = vmatprep.subr.mxu0 0.0
    %198 = vmatpush1.msra.mxu0 %v161
    %199 = vmatprep.subr.mxu0 0.0
    %200 = vmatpush1.msra.mxu0 %v162
    %201 = vmatprep.subr.mxu0 0.0
    %202 = vmatpush1.msra.mxu0 %v163
    %203 = vmatprep.subr.mxu0 0.0
    %204 = vmatpush1.msra.mxu0 0.0
    %205 = vmatprep.subr.mxu0 0.0
    %206 = vmatpush1.msra.mxu0 0.0
    %207 = vmatprep.subr.mxu0 0.0
    %208 = vmatpush1.msra.mxu0 0.0
    %209 = vmatprep.subr.mxu0 0.0
    %210 = vmatpush1.msra.mxu0 0.0
    %211 = vmatprep.subr.mxu0 0.0
    %212 = vmatpush1.msra.mxu0 0.0
    %213 = vmatprep.subr.mxu0 0.0
    %214 = vmatpush1.msra.mxu0 0.0
    %215 = vmatprep.subr.mxu0 0.0
    %216 = vmatpush1.msra.mxu0 0.0
    %217 = vmatprep.subr.mxu0 0.0
    %218 = vmatpush1.msra.mxu0 0.0
    %219 = vmatprep.subr.mxu0 0.0
    %220 = vmatpush1.msra.mxu0 0.0
    %221 = vmatprep.subr.mxu0 0.0
    %222 = vmatpush1.msra.mxu0 0.0
    %223 = vmatprep.subr.mxu0 0.0
    %224 = vmatpush1.msra.mxu0 0.0
    %225 = vmatprep.subr.mxu0 0.0
    %226 = vmatpush1.msra.mxu0 0.0
    %227 = vmatprep.subr.mxu0 0.0
    %228 = vmatpush1.msra.mxu0 0.0
    %229 = vmatprep.subr.mxu0 0.0
    %230 = vmatpush1.msra.mxu0 0.0
    %231 = vmatprep.subr.mxu0 0.0
    %232 = vmatpush1.msra.mxu0 0.0
    %233 = vmatprep.subr.mxu0 0.0
    %234 = vmatpush1.msra.mxu0 0.0
    %235 = vmatprep.mubr.f32.mxu0 0.0
    %236 = vmatmul.mubr.f32.gmra.mrb[0].mxu0 %v147
    %v237 = vpop.f32.mrb[0].mxu0
    %v238 = vadd.f32 %v169, %v237
    %v239 = vpop.f32.mrb[0].mxu0
    %240 = vdwg.mxu0
    %241 = vst [vmem:[#allocation8] sm:$0xff] %v238
    %v242 = vlaneseq
    %v243 = vand.u32 %v242, 127
    %vm244 = vcmp.lt.s32.totalorder %v243, 4
    %v245 = vsel %vm244, %v238, -1e+30
    %246 = vmax.xlane.f32.xlu0 %v245
    %v247 = vpop.xlane.xlu0 %246
    %v248 = vsub.f32 %v245, %v247
    %v249 = vmul.f32 %v248, 1.442695
    %v250 = vpow.pop %v249
    %251 = vadd.xlane.f32.xlu0 %v250
    %v252 = vpop.xlane.xlu0 %251
    %v253 = vlog2.pop %v252
    %v254 = vmul.f32 %v253, 0.6931472
    %v255 = vadd.f32 %v247, %v254
    %v256 = vsub.f32 %v238, %v255
    %v257 = vsel %vm244, %v256, 0.0
    %v258 = vrcp.pop %v252
    %v259 = vmul.f32 %v250, %v258
    %v260 = vmul.f32 %v259, %v257
    %261 = vadd.xlane.f32.xlu0 %v260
    %v262 = vpop.xlane.xlu0 %261
    %v263 = vsub.f32 0.0, %v262
    %vm264 = vcmp.eq.s32.totalorder %v243, 4
    %v265 = vsel %vm264, %v263, %v257
    %266 = vst [vmem:[#allocation9] sm:$0xff] %v265
    // Predicated region
    $region34: #{tpu_custom_call.1} parent=1 // pred_check
      _
    $region35: #{tpu_custom_call.1} parent=1 // pred_check_branch
      %268 = sbr.rel (0) target = $region37
    $region36: #{tpu_custom_call.1} parent=1 // pred_region
      %s270 = ssub.s32 128, 128
      %271 = vsyncadd [#allocation4], %s270
      %s273 = sshll.u32 [#allocation8], 4
      %s274 = int_to_ptr.vmem [resolvable:$true] %s273
      %276 = dma.vmem_to_hbm [thread:$0]  %s274, 128, %s5, [#allocation4]
    $region37: #{tpu_custom_call.1} parent=1 // pred_fallthru
      _
    // Predicated region
    $region38: #{tpu_custom_call.1} parent=1 // pred_check
      _
    $region39: #{tpu_custom_call.1} parent=1 // pred_check_branch
      %278 = sbr.rel (0) target = $region41
    $region40: #{tpu_custom_call.1} parent=1 // pred_region
      %s280 = ssub.s32 128, 128
      %281 = vsyncadd [#allocation10], %s280
      %s283 = sshll.u32 [#allocation9], 4
      %s284 = int_to_ptr.vmem [resolvable:$true] %s283
      %286 = dma.vmem_to_hbm [thread:$0]  %s284, 128, %s6, [#allocation10]
    $region41: #{tpu_custom_call.1} parent=1 // pred_fallthru
      _
    // Predicated region
    $region42: #{tpu_custom_call.1} parent=1 // pred_check
      _
    $region43: #{tpu_custom_call.1} parent=1 // pred_check_branch
      %288 = sbr.rel (0) target = $region45
    $region44: #{tpu_custom_call.1} parent=1 // pred_region
      %289 = dma.done [#allocation4], 128
    $region45: #{tpu_custom_call.1} parent=1 // pred_fallthru
      _
    // Predicated region
    $region46: #{tpu_custom_call.1} parent=1 // pred_check
      _
    $region47: #{tpu_custom_call.1} parent=1 // pred_check_branch
      %291 = sbr.rel (0) target = $region49
    $region48: #{tpu_custom_call.1} parent=1 // pred_region
      %292 = dma.done [#allocation10], 128
    $region49: #{tpu_custom_call.1} parent=1 // pred_fallthru
      _
    %293 = vsyncpa [#allocation3], 1
    %294 = vsyncpa [#allocation6], 1
    %295 = vsyncpa [#allocation4], 1
    %296 = vsyncpa [#allocation10], 1

// kernel: tpu_custom_call.1
$region0: #{tpu_custom_call.1}
  #allocation0 [shape = 'u32[]', space=smem, size = 0x4, offset = 0x4, fixed_abs, tag = 'smem constant byte address 0x4 - core index']
  #allocation1 [shape = 'u32[144,128]{1,0:T(1,128)}', space=vmem, size = 0x12000, scoped, tag = 'internal scratch']
  %s0 = inlined_call_operand.hbm [shape: f32[8,16], index: 0, kind: input, shape index: {}]
  %s1 = inlined_call_operand.hbm [shape: f32[16,128], index: 1, kind: input, shape index: {}]
  %s2 = inlined_call_operand.vmem [shape: f32[1,128], index: 2, kind: input, shape index: {}]
  %s3 = inlined_call_operand.hbm [shape: f32[128,128], index: 3, kind: input, shape index: {}]
  %s4 = inlined_call_operand.vmem [shape: f32[1,128], index: 4, kind: input, shape index: {}]
  %s5 = inlined_call_operand.hbm [shape: f32[8,128], index: 5, kind: output, shape index: {0}]
  %s6 = inlined_call_operand.hbm [shape: f32[8,128], index: 6, kind: output, shape index: {1}]
  %7 = xla_tuple %s5, %s6
  %s8 = sld [smem:[#allocation0]]
  $region50: #{tpu_custom_call.1} parent=0
    _
  %s10 = ssub.s32 1, %s8
  %s11 = scalar_select 0, %s10, %s8
  $region1: #{tpu_custom_call.1} parent=0
    #allocation2 [shape = 'u8[4096]{0}', space=vmem, size = 0x1000, scoped, tag = 'input window, operand 0, single buffered']
    #allocation3 [shape = 's32[1]{0}', space=sflag, size = 0x4, scoped, tag = 'scoped memory for tpu_custom_call.1']
    #allocation4 [shape = 's32[1]{0}', space=sflag, size = 0x4, scoped, tag = 'scoped memory for tpu_custom_call.1']
    #allocation5 [shape = 'u8[8192]{0}', space=vmem, size = 0x2000, scoped, tag = 'input window, operand 1, single buffered']
    #allocation6 [shape = 's32[1]{0}', space=sflag, size = 0x4, scoped, tag = 'scoped memory for tpu_custom_call.1']
    #allocation7 [shape = 'u8[65536]{0}', space=vmem, size = 0x10000, scoped, tag = 'input window, operand 3, single buffered']
    #allocation8 [shape = 'u8[4096]{0}', space=vmem, size = 0x1000, scoped, tag = 'output window, operand 0, single buffered']
    #allocation9 [shape = 'u8[4096]{0}', space=vmem, size = 0x1000, scoped, tag = 'output window, operand 1, single buffered']
    #allocation10 [shape = 's32[1]{0}', space=sflag, size = 0x4, scoped, tag = 'scoped memory for tpu_custom_call.1']
    %12 = vsyncpa [#allocation3], 0
    %13 = vsyncpa [#allocation6], 0
    %14 = vsyncpa [#allocation4], 0
    %15 = vsyncpa [#allocation10], 0
    // Predicated region
    $region2: #{tpu_custom_call.1} parent=1 // pred_check
      _
    $region3: #{tpu_custom_call.1} parent=1 // pred_check_branch
      %17 = sbr.rel (0) target = $region5
    $region4: #{tpu_custom_call.1} parent=1 // pred_region
      %s19 = ssub.s32 128, 128
      %20 = vsyncadd [#allocation3], %s19
      %s22 = sshll.u32 [#allocation2], 4
      %s23 = int_to_ptr.vmem [resolvable:$true] %s22
      %25 = dma.hbm_to_vmem [thread:$0]  %s0, 128, %s23, [#allocation3]
    $region5: #{tpu_custom_call.1} parent=1 // pred_fallthru
      _
    // Predicated region
    $region6: #{tpu_custom_call.1} parent=1 // pred_check
      _
    $region7: #{tpu_custom_call.1} parent=1 // pred_check_branch
      %27 = sbr.rel (0) target = $region9
    $region8: #{tpu_custom_call.1} parent=1 // pred_region
      %s29 = ssub.s32 256, 256
      %30 = vsyncadd [#allocation6], %s29
      %s31 = sshll.u32 [#allocation5], 4
      %s32 = int_to_ptr.vmem [resolvable:$true] %s31
      %37 = dma.hbm_to_vmem [thread:$0]  %s1, 256, %s32, [#allocation6], 128, 128, 8
    $region9: #{tpu_custom_call.1} parent=1 // pred_fallthru
      _
    // Predicated region
    $region10: #{tpu_custom_call.1} parent=1 // pred_check
      _
    $region11: #{tpu_custom_call.1} parent=1 // pred_check_branch
      %39 = sbr.rel (0) target = $region13
    $region12: #{tpu_custom_call.1} parent=1 // pred_region
      _
    $region13: #{tpu_custom_call.1} parent=1 // pred_fallthru
      _
    // Predicated region
    $region14: #{tpu_custom_call.1} parent=1 // pred_check
      _
    $region15: #{tpu_custom_call.1} parent=1 // pred_check_branch
      %41 = sbr.rel (0) target = $region17
    $region16: #{tpu_custom_call.1} parent=1 // pred_region
      %s43 = ssub.s32 2048, 2048
      %44 = vsyncadd [#allocation6], %s43
      %s45 = sshll.u32 [#allocation7], 4
      %s46 = int_to_ptr.vmem [resolvable:$true] %s45
      %51 = dma.hbm_to_vmem [thread:$0]  %s3, 2048, %s46, [#allocation6], 128, 128, 8
    $region17: #{tpu_custom_call.1} parent=1 // pred_fallthru
      _
    // Predicated region
    $region18: #{tpu_custom_call.1} parent=1 // pred_check
      _
    $region19: #{tpu_custom_call.1} parent=1 // pred_check_branch
      %53 = sbr.rel (0) target = $region21
    $region20: #{tpu_custom_call.1} parent=1 // pred_region
      _
    $region21: #{tpu_custom_call.1} parent=1 // pred_fallthru
      _
    // Predicated region
    $region22: #{tpu_custom_call.1} parent=1 // pred_check
      _
    $region23: #{tpu_custom_call.1} parent=1 // pred_check_branch
      %55 = sbr.rel (0) target = $region25
    $region24: #{tpu_custom_call.1} parent=1 // pred_region
      %56 = dma.done [#allocation3], 128
    $region25: #{tpu_custom_call.1} parent=1 // pred_fallthru
      _
    // Predicated region
    $region26: #{tpu_custom_call.1} parent=1 // pred_check
      _
    $region27: #{tpu_custom_call.1} parent=1 // pred_check_branch
      %58 = sbr.rel (0) target = $region29
    $region28: #{tpu_custom_call.1} parent=1 // pred_region
      %59 = dma.done [#allocation6], 256
    $region29: #{tpu_custom_call.1} parent=1 // pred_fallthru
      _
    // Predicated region
    $region30: #{tpu_custom_call.1} parent=1 // pred_check
      _
    $region31: #{tpu_custom_call.1} parent=1 // pred_check_branch
      %61 = sbr.rel (0) target = $region33
    $region32: #{tpu_custom_call.1} parent=1 // pred_region
      %62 = dma.done [#allocation6], 2048
    $region33: #{tpu_custom_call.1} parent=1 // pred_fallthru
      _
    %v63 = vld [vmem:[#allocation2] sm:$0xff]
    %v64 = vld [vmem:[#allocation5] sm:$0xff]
    %v65 = vld [vmem:[#allocation5 + $0x8] sm:$0xff]
    %v66 = vld [vmem:[%s2] sm:$0x1]
    %v68 = vlaneseq
    %v69 = vshrl.u32 %v68, 7
    %v70 = vsub.s32 0, %v69
    %v71 = vrot.slane %v66, %v70
    %vm73 = vcmask 130048
    %v75 = vsel %vm73, %v63, 0
    %77 = vmatprep.subr.mxu0 0.0
    %78 = vmatpush1.msra.mxu0 %v64
    %79 = vmatprep.subr.mxu0 0.0
    %80 = vmatpush1.msra.mxu0 %v65
    %81 = vmatprep.subr.mxu0 0.0
    %82 = vmatpush1.msra.mxu0 0.0
    %83 = vmatprep.subr.mxu0 0.0
    %84 = vmatpush1.msra.mxu0 0.0
    %85 = vmatprep.subr.mxu0 0.0
    %86 = vmatpush1.msra.mxu0 0.0
    %87 = vmatprep.subr.mxu0 0.0
    %88 = vmatpush1.msra.mxu0 0.0
    %89 = vmatprep.subr.mxu0 0.0
    %90 = vmatpush1.msra.mxu0 0.0
    %91 = vmatprep.subr.mxu0 0.0
    %92 = vmatpush1.msra.mxu0 0.0
    %93 = vmatprep.subr.mxu0 0.0
    %94 = vmatpush1.msra.mxu0 0.0
    %95 = vmatprep.subr.mxu0 0.0
    %96 = vmatpush1.msra.mxu0 0.0
    %97 = vmatprep.subr.mxu0 0.0
    %98 = vmatpush1.msra.mxu0 0.0
    %99 = vmatprep.subr.mxu0 0.0
    %100 = vmatpush1.msra.mxu0 0.0
    %101 = vmatprep.subr.mxu0 0.0
    %102 = vmatpush1.msra.mxu0 0.0
    %103 = vmatprep.subr.mxu0 0.0
    %104 = vmatpush1.msra.mxu0 0.0
    %105 = vmatprep.subr.mxu0 0.0
    %106 = vmatpush1.msra.mxu0 0.0
    %107 = vmatprep.subr.mxu0 0.0
    %108 = vmatpush1.msra.mxu0 0.0
    %109 = vmatprep.subr.mxu0 0.0
    %110 = vmatpush1.msra.mxu0 0.0
    %111 = vmatprep.subr.mxu0 0.0
    %112 = vmatpush1.msra.mxu0 0.0
    %113 = vmatprep.subr.mxu0 0.0
    %114 = vmatpush1.msra.mxu0 0.0
    %115 = vmatprep.subr.mxu0 0.0
    %116 = vmatpush1.msra.mxu0 0.0
    %117 = vmatprep.subr.mxu0 0.0
    %118 = vmatpush1.msra.mxu0 0.0
    %119 = vmatprep.subr.mxu0 0.0
    %120 = vmatpush1.msra.mxu0 0.0
    %121 = vmatprep.subr.mxu0 0.0
    %122 = vmatpush1.msra.mxu0 0.0
    %123 = vmatprep.subr.mxu0 0.0
    %124 = vmatpush1.msra.mxu0 0.0
    %125 = vmatprep.subr.mxu0 0.0
    %126 = vmatpush1.msra.mxu0 0.0
    %127 = vmatprep.subr.mxu0 0.0
    %128 = vmatpush1.msra.mxu0 0.0
    %129 = vmatprep.subr.mxu0 0.0
    %130 = vmatpush1.msra.mxu0 0.0
    %131 = vmatprep.subr.mxu0 0.0
    %132 = vmatpush1.msra.mxu0 0.0
    %133 = vmatprep.subr.mxu0 0.0
    %134 = vmatpush1.msra.mxu0 0.0
    %135 = vmatprep.subr.mxu0 0.0
    %136 = vmatpush1.msra.mxu0 0.0
    %137 = vmatprep.subr.mxu0 0.0
    %138 = vmatpush1.msra.mxu0 0.0
    %139 = vmatprep.subr.mxu0 0.0
    %140 = vmatpush1.msra.mxu0 0.0
    %141 = vmatprep.mubr.f32.mxu0 0.0
    %142 = vmatmul.mubr.f32.gmra.mrb[0].mxu0 %v75
    %v143 = vpop.f32.mrb[0].mxu0
    %v144 = vadd.f32 %v71, %v143
    %v145 = vpop.f32.mrb[0].mxu0
    %146 = vdwg.mxu0
    %v147 = vmax.f32 %v144, 0.0
    %v148 = vld [vmem:[#allocation7] sm:$0xff]
    %v149 = vld [vmem:[#allocation7 + $0x8] sm:$0xff]
    %v150 = vld [vmem:[#allocation7 + $0x10] sm:$0xff]
    %v151 = vld [vmem:[#allocation7 + $0x18] sm:$0xff]
    %v152 = vld [vmem:[#allocation7 + $0x20] sm:$0xff]
    %v153 = vld [vmem:[#allocation7 + $0x28] sm:$0xff]
    %v154 = vld [vmem:[#allocation7 + $0x30] sm:$0xff]
    %v155 = vld [vmem:[#allocation7 + $0x38] sm:$0xff]
    %v156 = vld [vmem:[#allocation7 + $0x40] sm:$0xff]
    %v157 = vld [vmem:[#allocation7 + $0x48] sm:$0xff]
    %v158 = vld [vmem:[#allocation7 + $0x50] sm:$0xff]
    %v159 = vld [vmem:[#allocation7 + $0x58] sm:$0xff]
    %v160 = vld [vmem:[#allocation7 + $0x60] sm:$0xff]
    %v161 = vld [vmem:[#allocation7 + $0x68] sm:$0xff]
    %v162 = vld [vmem:[#allocation7 + $0x70] sm:$0xff]
    %v163 = vld [vmem:[#allocation7 + $0x78] sm:$0xff]
    %v164 = vld [vmem:[%s4] sm:$0x1]
    %v166 = vlaneseq
    %v167 = vshrl.u32 %v166, 7
    %v168 = vsub.s32 0, %v167
    %v169 = vrot.slane %v164, %v168
    %171 = vmatprep.subr.mxu0 0.0
    %172 = vmatpush1.msra.mxu0 %v148
    %173 = vmatprep.subr.mxu0 0.0
    %174 = vmatpush1.msra.mxu0 %v149
    %175 = vmatprep.subr.mxu0 0.0
    %176 = vmatpush1.msra.mxu0 %v150
    %177 = vmatprep.subr.mxu0 0.0
    %178 = vmatpush1.msra.mxu0 %v151
    %179 = vmatprep.subr.mxu0 0.0
    %180 = vmatpush1.msra.mxu0 %v152
    %181 = vmatprep.subr.mxu0 0.0
    %182 = vmatpush1.msra.mxu0 %v153
    %183 = vmatprep.subr.mxu0 0.0
    %184 = vmatpush1.msra.mxu0 %v154
    %185 = vmatprep.subr.mxu0 0.0
    %186 = vmatpush1.msra.mxu0 %v155
    %187 = vmatprep.subr.mxu0 0.0
    %188 = vmatpush1.msra.mxu0 %v156
    %189 = vmatprep.subr.mxu0 0.0
    %190 = vmatpush1.msra.mxu0 %v157
    %191 = vmatprep.subr.mxu0 0.0
    %192 = vmatpush1.msra.mxu0 %v158
    %193 = vmatprep.subr.mxu0 0.0
    %194 = vmatpush1.msra.mxu0 %v159
    %195 = vmatprep.subr.mxu0 0.0
    %196 = vmatpush1.msra.mxu0 %v160
    %197 = vmatprep.subr.mxu0 0.0
    %198 = vmatpush1.msra.mxu0 %v161
    %199 = vmatprep.subr.mxu0 0.0
    %200 = vmatpush1.msra.mxu0 %v162
    %201 = vmatprep.subr.mxu0 0.0
    %202 = vmatpush1.msra.mxu0 %v163
    %203 = vmatprep.subr.mxu0 0.0
    %204 = vmatpush1.msra.mxu0 0.0
    %205 = vmatprep.subr.mxu0 0.0
    %206 = vmatpush1.msra.mxu0 0.0
    %207 = vmatprep.subr.mxu0 0.0
    %208 = vmatpush1.msra.mxu0 0.0
    %209 = vmatprep.subr.mxu0 0.0
    %210 = vmatpush1.msra.mxu0 0.0
    %211 = vmatprep.subr.mxu0 0.0
    %212 = vmatpush1.msra.mxu0 0.0
    %213 = vmatprep.subr.mxu0 0.0
    %214 = vmatpush1.msra.mxu0 0.0
    %215 = vmatprep.subr.mxu0 0.0
    %216 = vmatpush1.msra.mxu0 0.0
    %217 = vmatprep.subr.mxu0 0.0
    %218 = vmatpush1.msra.mxu0 0.0
    %219 = vmatprep.subr.mxu0 0.0
    %220 = vmatpush1.msra.mxu0 0.0
    %221 = vmatprep.subr.mxu0 0.0
    %222 = vmatpush1.msra.mxu0 0.0
    %223 = vmatprep.subr.mxu0 0.0
    %224 = vmatpush1.msra.mxu0 0.0
    %225 = vmatprep.subr.mxu0 0.0
    %226 = vmatpush1.msra.mxu0 0.0
    %227 = vmatprep.subr.mxu0 0.0
    %228 = vmatpush1.msra.mxu0 0.0
    %229 = vmatprep.subr.mxu0 0.0
    %230 = vmatpush1.msra.mxu0 0.0
    %231 = vmatprep.subr.mxu0 0.0
    %232 = vmatpush1.msra.mxu0 0.0
    %233 = vmatprep.subr.mxu0 0.0
    %234 = vmatpush1.msra.mxu0 0.0
    %235 = vmatprep.mubr.f32.mxu0 0.0
    %236 = vmatmul.mubr.f32.gmra.mrb[0].mxu0 %v147
    %v237 = vpop.f32.mrb[0].mxu0
    %v238 = vadd.f32 %v169, %v237
    %v239 = vpop.f32.mrb[0].mxu0
    %240 = vdwg.mxu0
    %241 = vst [vmem:[#allocation8] sm:$0xff] %v238
    %v242 = vlaneseq
    %v243 = vand.u32 %v242, 127
    %vm244 = vcmp.lt.s32.totalorder %v243, 4
    %v245 = vsel %vm244, %v238, -1e+30
    %246 = vmax.xlane.f32.xlu0 %v245
    %v247 = vpop.xlane.xlu0 %246
    %v248 = vsub.f32 %v245, %v247
    %v249 = vmul.f32 %v248, 1.442695
    %v250 = vpow.pop %v249
    %251 = vadd.xlane.f32.xlu0 %v250
    %v252 = vpop.xlane.xlu0 %251
    %v253 = vlog2.pop %v252
    %v254 = vmul.f32 %v253, 0.6931472
    %v255 = vadd.f32 %v247, %v254
    %v256 = vsub.f32 %v238, %v255
    %v257 = vsel %vm244, %v256, 0.0
    %v258 = vrcp.pop %v252
    %v259 = vmul.f32 %v250, %v258
    %v260 = vmul.f32 %v259, %v257
    %261 = vadd.xlane.f32.xlu0 %v260
    %v262 = vpop.xlane.xlu0 %261
    %v263 = vsub.f32 0.0, %v262
    %vm264 = vcmp.eq.s32.totalorder %v243, 4
    %v265 = vsel %vm264, %v263, %v257
    %266 = vst [vmem:[#allocation9] sm:$0xff] %v265
    // Predicated region
    $region34: #{tpu_custom_call.1} parent=1 // pred_check
      _
    $region35: #{tpu_custom_call.1} parent=1 // pred_check_branch
      %268 = sbr.rel (0) target = $region37
    $region36: #{tpu_custom_call.1} parent=1 // pred_region
      %s270 = ssub.s32 128, 128
      %271 = vsyncadd [#allocation4], %s270
      %s273 = sshll.u32 [#allocation8], 4
      %s274 = int_to_ptr.vmem [resolvable:$true] %s273
      %276 = dma.vmem_to_hbm [thread:$0]  %s274, 128, %s5, [#allocation4]
    $region37: #{tpu_custom_call.1} parent=1 // pred_fallthru
      _
    // Predicated region
    $region38: #{tpu_custom_call.1} parent=1 // pred_check
      _
    $region39: #{tpu_custom_call.1} parent=1 // pred_check_branch
      %278 = sbr.rel (0) target = $region41
    $region40: #{tpu_custom_call.1} parent=1 // pred_region
      %s280 = ssub.s32 128, 128
      %281 = vsyncadd [#allocation10], %s280
      %s283 = sshll.u32 [#allocation9], 4
      %s284 = int_to_ptr.vmem [resolvable:$true] %s283
      %286 = dma.vmem_to_hbm [thread:$0]  %s284, 128, %s6, [#allocation10]
    $region41: #{tpu_custom_call.1} parent=1 // pred_fallthru
      _
    // Predicated region
    $region42: #{tpu_custom_call.1} parent=1 // pred_check
      _
    $region43: #{tpu_custom_call.1} parent=1 // pred_check_branch
      %288 = sbr.rel (0) target = $region45
    $region44: #{tpu_custom_call.1} parent=1 // pred_region
      %289 = dma.done [#allocation4], 128
    $region45: #{tpu_custom_call.1} parent=1 // pred_fallthru
      _
    // Predicated region
    $region46: #{tpu_custom_call.1} parent=1 // pred_check
      _
    $region47: #{tpu_custom_call.1} parent=1 // pred_check_branch
      %291 = sbr.rel (0) target = $region49
    $region48: #{tpu_custom_call.1} parent=1 // pred_region
      %292 = dma.done [#allocation10], 128
    $region49: #{tpu_custom_call.1} parent=1 // pred_fallthru
      _
    %293 = vsyncpa [#allocation3], 1
    %294 = vsyncpa [#allocation6], 1
    %295 = vsyncpa [#allocation4], 1
    %296 = vsyncpa [#allocation10], 1

</llo_original>
